<compile_context>
chip_gen: v5e
topology: v5e:2x2
jax: 0.10.0
libtpu: 0.0.40
codegen_flags: <defaults>
</compile_context>

<pallas_src>
import jax
import jax.numpy as jnp
from jax.experimental import pallas as pl
from jax.experimental.pallas import tpu as pltpu

LANE = 128      # TPU lane width (last vreg dim)
SUBLANE = 8     # f32 sublane pack


def _round_up(x, m):
    return (x + m - 1) // m * m


def _make_actor_kernel(meta):
    s_dim = meta["s_dim"]
    belief_dim = meta["belief_dim"]
    belief_off = meta["belief_off"]
    b1_row = meta["b1_row"]
    wh_row = meta["wh_row"]
    w5_row = meta["w5_row"]
    H = meta["H"]
    A = meta["A"]

    def kernel(state_ref, belief_ref, p_ref, out_ref):
        # fc1: split matmul over the packed slab (no in-kernel concat, no
        # cross-lane shuffles) plus ONE bias row.  The bias row also sets the
        # "ones slot" at column H-1 so every later bias rides inside its
        # matmul for free on the MXU.
        h = (jnp.dot(state_ref[...], p_ref[0:s_dim, :H],
                     preferred_element_type=jnp.float32)
             + jnp.dot(belief_ref[...],
                       p_ref[belief_off:belief_off + belief_dim, :H],
                       preferred_element_type=jnp.float32)
             + p_ref[b1_row:b1_row + 1, :H])
        h = jnp.maximum(h, 0.0)                 # relu; ones slot: relu(1) == 1

        # fc2..fc4: bias folded into row H-1 of each [H, H] block, the ones
        # slot self-propagates (W_aug[H-1, H-1] == 1): one MXU matmul + relu.
        for k in range(3):
            r = wh_row + k * H
            h = jnp.maximum(
                jnp.dot(h, p_ref[r:r + H, :H],
                        preferred_element_type=jnp.float32),
                0.0)

        # fc5 logits head (bias folded): lane-dense [B_pad, A] store.
        out_ref[...] = jnp.dot(h, p_ref[w5_row:w5_row + H, :A],
                               preferred_element_type=jnp.float32
                               ).astype(out_ref.dtype)

    return kernel


def actor_forward(state, belief, params):
    """state: [B, s_dim], belief: [B, belief_dim] -> logits [B, a_dim]."""
    meta = params["meta"]
    B = state.shape[0]
    a_dim = meta["a_dim"]
    A = meta["A"]

    # Sublane-dense batch: pad rows to a multiple of 8 outside the kernel.
    B_pad = max(SUBLANE, _round_up(B, SUBLANE))
    if B_pad != B:
        state = jnp.pad(state, ((0, B_pad - B), (0, 0)))
        belief = jnp.pad(belief, ((0, B_pad - B), (0, 0)))

    kernel = _make_actor_kernel(meta)
    vmem = pl.BlockSpec(memory_space=pltpu.MemorySpace.VMEM)

    # Ungridded call: activations + ~0.3 MiB param slab sit in VMEM on
    # v5e/v6e/v7x; exactly 3 operand DMAs + 1 output DMA.
    out = pl.pallas_call(
        kernel,
        out_shape=jax.ShapeDtypeStruct((B_pad, A), jnp.float32),
        in_specs=[vmem, vmem, vmem],
        out_specs=vmem,
    )(state, belief, params["p"])

    # Slice batch/lane padding off outside the kernel (numerically exact).
    return out[:B, :a_dim]


def init_actor_params(key, s_dim, belief_dim, a_dim, h_dim):
    """Init matching nn.Linear fan-in bounds, packed into one [R, 128] slab.

    Slab layout (all rows 128 lanes wide, zero padded):
      rows [0, s_dim)                      : w1 state block   -> cols [0, h_dim)
      rows [belief_off, +belief_dim)       : w1 belief block  -> cols [0, h_dim)
      row  b1_row                          : b1 (+ ones slot at col H-1)
      rows [wh_row + k*H, +H), k=0..2      : fc{2,3,4} aug. weights
                                             (bias in row H-1, W[H-1,H-1]=1)
      rows [w5_row, +H)                    : fc5 aug. weight (bias in row H-1)
    """
    H = _round_up(h_dim + 1, LANE)          # hidden width incl. ones slot
    A = _round_up(a_dim, LANE)              # lane-dense logits width
    PW = max(H, A)                          # slab lane width
    in_dim = s_dim + belief_dim

    belief_off = _round_up(s_dim, SUBLANE)
    b1_row = _round_up(belief_off + belief_dim, SUBLANE)
    wh_row = _round_up(b1_row + 1, SUBLANE)
    w5_row = wh_row + 3 * H
    R = w5_row + H

    def uniform(k, shape, fan_in):
        bound = 1.0 / jnp.sqrt(jnp.float32(fan_in))
        return jax.random.uniform(k, shape, jnp.float32, -bound, bound)

    key, k1w, k1b = jax.random.split(key, 3)
    w1 = uniform(k1w, (in_dim, h_dim), in_dim)
    b1 = uniform(k1b, (h_dim,), in_dim)

    wh, bh = [], []
    for _ in range(3):
        key, kw, kb = jax.random.split(key, 3)
        wh.append(uniform(kw, (h_dim, h_dim), h_dim))
        bh.append(uniform(kb, (h_dim,), h_dim))

    key, k5w, k5b = jax.random.split(key, 3)
    w5 = uniform(k5w, (h_dim, a_dim), h_dim)
    b5 = uniform(k5b, (a_dim,), h_dim)

    p = jnp.zeros((R, PW), jnp.float32)
    p = p.at[0:s_dim, :h_dim].set(w1[:s_dim])
    p = p.at[belief_off:belief_off + belief_dim, :h_dim].set(w1[s_dim:])
    p = p.at[b1_row, :h_dim].set(b1)
    p = p.at[b1_row, H - 1].set(1.0)                    # ones slot seed
    for k in range(3):
        r = wh_row + k * H
        p = p.at[r:r + h_dim, :h_dim].set(wh[k])
        p = p.at[r + H - 1, :h_dim].set(bh[k])          # folded bias
        p = p.at[r + H - 1, H - 1].set(1.0)             # propagate ones slot
    p = p.at[w5_row:w5_row + h_dim, :a_dim].set(w5)
    p = p.at[w5_row + H - 1, :a_dim].set(b5)            # folded head bias

    meta = dict(s_dim=s_dim, belief_dim=belief_dim, a_dim=a_dim, h_dim=h_dim,
                H=H, A=A, belief_off=belief_off, b1_row=b1_row,
                wh_row=wh_row, w5_row=w5_row)
    raw = dict(w1=w1, b1=b1, wh=wh, bh=bh, w5=w5, b5=b5)
    return {"p": p, "meta": meta, "raw": raw}


def actor_forward_ref(state, belief, raw):
    """Pure-JAX reference of the PyTorch forward, for verification."""
    x = jnp.concatenate([state, belief], axis=1)
    h = jax.nn.relu(x @ raw["w1"] + raw["b1"])
    for i in range(3):
        h = jax.nn.relu(h @ raw["wh"][i] + raw["bh"][i])
    return h @ raw["w5"] + raw["b5"]


if __name__ == "__main__":
    # Small shapes consistent with the module's forward.
    B, s_dim, belief_dim, a_dim, h_dim = 2, 8, 24, 4, 32

    key = jax.random.PRNGKey(0)
    key, ks, kb = jax.random.split(key, 3)
    state = jax.random.normal(ks, (B, s_dim), jnp.float32)
    belief = jax.random.normal(kb, (B, belief_dim), jnp.float32)

    params = init_actor_params(key, s_dim, belief_dim, a_dim, h_dim)

    logits = actor_forward(state, belief, params)
    jax.block_until_ready(logits)

    ref = actor_forward_ref(state, belief, params["raw"])
    assert logits.shape == (B, a_dim)
    assert jnp.allclose(logits, ref, atol=1e-5, rtol=1e-5), "mismatch vs reference"

    print("KERNEL_OK")
</pallas_src>

<mosaic_0001>
module attributes {stable_mosaic.version = 11 : i64} {
  func.func @kernel(%arg0: memref<8x8xf32, #tpu.memory_space<vmem>>, %arg1: memref<8x24xf32, #tpu.memory_space<vmem>>, %arg2: memref<552x128xf32, #tpu.memory_space<vmem>>, %arg3: memref<8x128xf32, #tpu.memory_space<vmem>>) attributes {dimension_semantics = [], scalar_prefetch = 0 : i64, scratch_operands = 0 : i64, tpu.core_type = #tpu.core_type<tc>} {
    %c0 = arith.constant 0 : index
    %c0_0 = arith.constant 0 : index
    %0 = vector.load %arg0[%c0, %c0_0] : memref<8x8xf32, #tpu.memory_space<vmem>>, vector<8x8xf32>
    %c0_1 = arith.constant 0 : index
    %c0_2 = arith.constant 0 : index
    %1 = vector.load %arg2[%c0_1, %c0_2] : memref<552x128xf32, #tpu.memory_space<vmem>>, vector<8x128xf32>
    %cst = arith.constant dense<0.000000e+00> : vector<8x128xf32>
    %2 = tpu.matmul %0, %1, %cst {dimension_numbers = #tpu.dot_dimension_numbers<[1], [0], [0], [1], [0, 0, 1, 1], [], []>} : vector<8x8xf32>, vector<8x128xf32>, vector<8x128xf32> -> vector<8x128xf32>
    %c0_3 = arith.constant 0 : index
    %c0_4 = arith.constant 0 : index
    %3 = vector.load %arg1[%c0_3, %c0_4] : memref<8x24xf32, #tpu.memory_space<vmem>>, vector<8x24xf32>
    %c8 = arith.constant 8 : index
    %c0_5 = arith.constant 0 : index
    %4 = vector.load %arg2[%c8, %c0_5] : memref<552x128xf32, #tpu.memory_space<vmem>>, vector<24x128xf32>
    %cst_6 = arith.constant dense<0.000000e+00> : vector<8x128xf32>
    %5 = tpu.matmul %3, %4, %cst_6 {dimension_numbers = #tpu.dot_dimension_numbers<[1], [0], [0], [1], [0, 0, 1, 1], [], []>} : vector<8x24xf32>, vector<24x128xf32>, vector<8x128xf32> -> vector<8x128xf32>
    %6 = arith.addf %2, %5 : vector<8x128xf32>
    %c32 = arith.constant 32 : index
    %c0_7 = arith.constant 0 : index
    %7 = vector.load %arg2[%c32, %c0_7] : memref<552x128xf32, #tpu.memory_space<vmem>>, vector<1x128xf32>
    %8 = vector.broadcast %7 : vector<1x128xf32> to vector<8x128xf32>
    %9 = arith.addf %6, %8 : vector<8x128xf32>
    %cst_8 = arith.constant 0.000000e+00 : f32
    %10 = vector.broadcast %cst_8 : f32 to vector<8x128xf32>
    %11 = arith.maximumf %9, %10 : vector<8x128xf32>
    %c40 = arith.constant 40 : index
    %c0_9 = arith.constant 0 : index
    %12 = vector.load %arg2[%c40, %c0_9] : memref<552x128xf32, #tpu.memory_space<vmem>>, vector<128x128xf32>
    %cst_10 = arith.constant dense<0.000000e+00> : vector<8x128xf32>
    %13 = tpu.matmul %11, %12, %cst_10 {dimension_numbers = #tpu.dot_dimension_numbers<[1], [0], [0], [1], [0, 0, 1, 1], [], []>} : vector<8x128xf32>, vector<128x128xf32>, vector<8x128xf32> -> vector<8x128xf32>
    %cst_11 = arith.constant 0.000000e+00 : f32
    %14 = vector.broadcast %cst_11 : f32 to vector<8x128xf32>
    %15 = arith.maximumf %13, %14 : vector<8x128xf32>
    %c168 = arith.constant 168 : index
    %c0_12 = arith.constant 0 : index
    %16 = vector.load %arg2[%c168, %c0_12] : memref<552x128xf32, #tpu.memory_space<vmem>>, vector<128x128xf32>
    %cst_13 = arith.constant dense<0.000000e+00> : vector<8x128xf32>
    %17 = tpu.matmul %15, %16, %cst_13 {dimension_numbers = #tpu.dot_dimension_numbers<[1], [0], [0], [1], [0, 0, 1, 1], [], []>} : vector<8x128xf32>, vector<128x128xf32>, vector<8x128xf32> -> vector<8x128xf32>
    %cst_14 = arith.constant 0.000000e+00 : f32
    %18 = vector.broadcast %cst_14 : f32 to vector<8x128xf32>
    %19 = arith.maximumf %17, %18 : vector<8x128xf32>
    %c296 = arith.constant 296 : index
    %c0_15 = arith.constant 0 : index
    %20 = vector.load %arg2[%c296, %c0_15] : memref<552x128xf32, #tpu.memory_space<vmem>>, vector<128x128xf32>
    %cst_16 = arith.constant dense<0.000000e+00> : vector<8x128xf32>
    %21 = tpu.matmul %19, %20, %cst_16 {dimension_numbers = #tpu.dot_dimension_numbers<[1], [0], [0], [1], [0, 0, 1, 1], [], []>} : vector<8x128xf32>, vector<128x128xf32>, vector<8x128xf32> -> vector<8x128xf32>
    %cst_17 = arith.constant 0.000000e+00 : f32
    %22 = vector.broadcast %cst_17 : f32 to vector<8x128xf32>
    %23 = arith.maximumf %21, %22 : vector<8x128xf32>
    %c424 = arith.constant 424 : index
    %c0_18 = arith.constant 0 : index
    %24 = vector.load %arg2[%c424, %c0_18] : memref<552x128xf32, #tpu.memory_space<vmem>>, vector<128x128xf32>
    %cst_19 = arith.constant dense<0.000000e+00> : vector<8x128xf32>
    %25 = tpu.matmul %23, %24, %cst_19 {dimension_numbers = #tpu.dot_dimension_numbers<[1], [0], [0], [1], [0, 0, 1, 1], [], []>} : vector<8x128xf32>, vector<128x128xf32>, vector<8x128xf32> -> vector<8x128xf32>
    %c0_20 = arith.constant 0 : index
    %c0_21 = arith.constant 0 : index
    %26 = vector.load %arg3[%c0_20, %c0_21] : memref<8x128xf32, #tpu.memory_space<vmem>>, vector<8x128xf32>
    tpu.vector_store %arg3[%c0_20, %c0_21], %25 {strides = array<i32>} : memref<8x128xf32, #tpu.memory_space<vmem>>, vector<8x128xf32>,
    return
  }
}

</mosaic_0001>

<llo_original>
// kernel: tpu_custom_call.1
$region0: #{tpu_custom_call.1}
  #allocation0 [shape = 'u32[]', space=smem, size = 0x4, offset = 0x4, fixed_abs, tag = 'smem constant byte address 0x4 - core index']
  #allocation1 [shape = 'u32[72,128]{1,0:T(1,128)}', space=vmem, size = 0x9000, scoped, tag = 'internal scratch']
  %s0 = inlined_call_operand.hbm [shape: f32[8,8], index: 0, kind: input, shape index: {}]
  %s1 = inlined_call_operand.hbm [shape: f32[8,24], index: 1, kind: input, shape index: {}]
  %s2 = inlined_call_operand.hbm [shape: f32[552,128], index: 2, kind: input, shape index: {}]
  %s3 = inlined_call_operand.hbm [shape: f32[8,128], index: 3, kind: output, shape index: {}]
  %s4 = sld [smem:[#allocation0]]
  $region34: #{tpu_custom_call.1} parent=0
    _
  %s6 = ssub.s32 1, %s4
  %s7 = scalar_select 0, %s6, %s4
  $region1: #{tpu_custom_call.1} parent=0
    #allocation2 [shape = 'u8[4096]{0}', space=vmem, size = 0x1000, scoped, tag = 'input window, operand 0, single buffered']
    #allocation3 [shape = 's32[1]{0}', space=sflag, size = 0x4, scoped, tag = 'scoped memory for tpu_custom_call.1']
    #allocation4 [shape = 's32[1]{0}', space=sflag, size = 0x4, scoped, tag = 'scoped memory for tpu_custom_call.1']
    #allocation5 [shape = 'u8[4096]{0}', space=vmem, size = 0x1000, scoped, tag = 'input window, operand 1, single buffered']
    #allocation6 [shape = 's32[1]{0}', space=sflag, size = 0x4, scoped, tag = 'scoped memory for tpu_custom_call.1']
    #allocation7 [shape = 'u8[282624]{0}', space=vmem, size = 0x45000, scoped, tag = 'input window, operand 2, single buffered']
    #allocation8 [shape = 'u8[4096]{0}', space=vmem, size = 0x1000, scoped, tag = 'output window, operand 0, single buffered']
    %8 = vsyncpa [#allocation3], 0
    %9 = vsyncpa [#allocation6], 0
    %10 = vsyncpa [#allocation4], 0
    // Predicated region
    $region2: #{tpu_custom_call.1} parent=1 // pred_check
      _
    $region3: #{tpu_custom_call.1} parent=1 // pred_check_branch
      %12 = sbr.rel (0) target = $region5
    $region4: #{tpu_custom_call.1} parent=1 // pred_region
      %14 = vsyncadd [#allocation3], 0
      %s16 = sshll.u32 %s0, 4
      %s17 = int_to_ptr.hbm [resolvable:$true] %s16
      %s18 = sshll.u32 [#allocation2], 4
      %s19 = int_to_ptr.vmem [resolvable:$true] %s18
      %21 = dma.hbm_to_vmem [thread:$0]  %s17, 128, %s19, [#allocation3]
    $region5: #{tpu_custom_call.1} parent=1 // pred_fallthru
      _
    // Predicated region
    $region6: #{tpu_custom_call.1} parent=1 // pred_check
      _
    $region7: #{tpu_custom_call.1} parent=1 // pred_check_branch
      %23 = sbr.rel (0) target = $region9
    $region8: #{tpu_custom_call.1} parent=1 // pred_region
      %25 = vsyncadd [#allocation6], 0
      %s27 = sshll.u32 %s1, 4
      %s28 = int_to_ptr.hbm [resolvable:$true] %s27
      %s29 = sshll.u32 [#allocation5], 4
      %s30 = int_to_ptr.vmem [resolvable:$true] %s29
      %32 = dma.hbm_to_vmem [thread:$0]  %s28, 128, %s30, [#allocation6]
    $region9: #{tpu_custom_call.1} parent=1 // pred_fallthru
      _
    // Predicated region
    $region10: #{tpu_custom_call.1} parent=1 // pred_check
      _
    $region11: #{tpu_custom_call.1} parent=1 // pred_check_branch
      %34 = sbr.rel (0) target = $region13
    $region12: #{tpu_custom_call.1} parent=1 // pred_region
      %36 = vsyncadd [#allocation6], 0
      %s37 = sshll.u32 %s2, 4
      %s38 = int_to_ptr.hbm [resolvable:$true] %s37
      %s39 = sshll.u32 [#allocation7], 4
      %s40 = int_to_ptr.vmem [resolvable:$true] %s39
      %45 = dma.hbm_to_vmem [thread:$0]  %s38, 8832, %s40, [#allocation6], 128, 128, 8
    $region13: #{tpu_custom_call.1} parent=1 // pred_fallthru
      _
    // Predicated region
    $region14: #{tpu_custom_call.1} parent=1 // pred_check
      _
    $region15: #{tpu_custom_call.1} parent=1 // pred_check_branch
      %47 = sbr.rel (0) target = $region17
    $region16: #{tpu_custom_call.1} parent=1 // pred_region
      %49 = dma.done [#allocation3], 128
    $region17: #{tpu_custom_call.1} parent=1 // pred_fallthru
      _
    // Predicated region
    $region18: #{tpu_custom_call.1} parent=1 // pred_check
      _
    $region19: #{tpu_custom_call.1} parent=1 // pred_check_branch
      %51 = sbr.rel (0) target = $region21
    $region20: #{tpu_custom_call.1} parent=1 // pred_region
      %53 = dma.done [#allocation6], 128
    $region21: #{tpu_custom_call.1} parent=1 // pred_fallthru
      _
    // Predicated region
    $region22: #{tpu_custom_call.1} parent=1 // pred_check
      _
    $region23: #{tpu_custom_call.1} parent=1 // pred_check_branch
      %55 = sbr.rel (0) target = $region25
    $region24: #{tpu_custom_call.1} parent=1 // pred_region
      %57 = dma.done [#allocation6], 8832
    $region25: #{tpu_custom_call.1} parent=1 // pred_fallthru
      _
    %v58 = vld [vmem:[#allocation2] sm:$0xff]
    %v59 = vld [vmem:[#allocation7] sm:$0xff]
    %v60 = vld [vmem:[#allocation5] sm:$0xff]
    %v61 = vld [vmem:[#allocation7 + $0x8] sm:$0xff]
    %v62 = vld [vmem:[#allocation7 + $0x10] sm:$0xff]
    %v63 = vld [vmem:[#allocation7 + $0x18] sm:$0xff]
    %vm64 = vcmask 195584
    %v66 = vsel %vm64, %v60, 0
    %68 = vmatpush.msra.mxu0 0.0
    %69 = vmatpush.msra.mxu0 0.0
    %70 = vmatpush.msra.mxu0 0.0
    %71 = vmatpush.msra.mxu0 0.0
    %72 = vmatpush.msra.mxu0 0.0
    %73 = vmatpush.msra.mxu0 0.0
    %74 = vmatpush.msra.mxu0 0.0
    %75 = vmatpush.msra.mxu0 0.0
    %76 = vmatpush.msra.mxu0 0.0
    %77 = vmatpush.msra.mxu0 0.0
    %78 = vmatpush.msra.mxu0 0.0
    %79 = vmatpush.msra.mxu0 0.0
    %80 = vmatpush.msra.mxu0 0.0
    %81 = vmatpush.msra.mxu0 %v63
    %82 = vmatpush.msra.mxu0 %v62
    %83 = vmatpush.msra.mxu0 %v61
    %84 = vmatmul.f32.gmra.mxu0 %v66
    %v85 = vpop.f32.mrf.mxu0
    %v86 = vadd.f32 0.0, %v85
    %87 = vdwg.mxu0
    %vm88 = vcmask 64512
    %v90 = vsel %vm88, %v58, 0
    %92 = vmatpush.msra.mxu0 0.0
    %93 = vmatpush.msra.mxu0 0.0
    %94 = vmatpush.msra.mxu0 0.0
    %95 = vmatpush.msra.mxu0 0.0
    %96 = vmatpush.msra.mxu0 0.0
    %97 = vmatpush.msra.mxu0 0.0
    %98 = vmatpush.msra.mxu0 0.0
    %99 = vmatpush.msra.mxu0 0.0
    %100 = vmatpush.msra.mxu0 0.0
    %101 = vmatpush.msra.mxu0 0.0
    %102 = vmatpush.msra.mxu0 0.0
    %103 = vmatpush.msra.mxu0 0.0
    %104 = vmatpush.msra.mxu0 0.0
    %105 = vmatpush.msra.mxu0 0.0
    %106 = vmatpush.msra.mxu0 0.0
    %107 = vmatpush.msra.mxu0 %v59
    %108 = vmatmul.f32.gmra.mxu0 %v90
    %v109 = vpop.f32.mrf.mxu0
    %v110 = vadd.f32 %v86, %v109
    %111 = vdwg.mxu0
    %v112 = vld [vmem:[#allocation7 + $0x20] sm:$0x1]
    %v113 = vperm.slane %v112, 0
    %v114 = vadd.f32 %v110, %v113
    %v115 = vmax.f32 %v114, 0.0
    %v116 = vld [vmem:[#allocation7 + $0x28] sm:$0xff]
    %v117 = vld [vmem:[#allocation7 + $0x30] sm:$0xff]
    %v118 = vld [vmem:[#allocation7 + $0x38] sm:$0xff]
    %v119 = vld [vmem:[#allocation7 + $0x40] sm:$0xff]
    %v120 = vld [vmem:[#allocation7 + $0x48] sm:$0xff]
    %v121 = vld [vmem:[#allocation7 + $0x50] sm:$0xff]
    %v122 = vld [vmem:[#allocation7 + $0x58] sm:$0xff]
    %v123 = vld [vmem:[#allocation7 + $0x60] sm:$0xff]
    %v124 = vld [vmem:[#allocation7 + $0x68] sm:$0xff]
    %v125 = vld [vmem:[#allocation7 + $0x70] sm:$0xff]
    %v126 = vld [vmem:[#allocation7 + $0x78] sm:$0xff]
    %v127 = vld [vmem:[#allocation7 + $0x80] sm:$0xff]
    %v128 = vld [vmem:[#allocation7 + $0x88] sm:$0xff]
    %v129 = vld [vmem:[#allocation7 + $0x90] sm:$0xff]
    %v130 = vld [vmem:[#allocation7 + $0x98] sm:$0xff]
    %v131 = vld [vmem:[#allocation7 + $0xa0] sm:$0xff]
    %132 = vmatpush.msra.mxu0 %v131
    %133 = vmatpush.msra.mxu0 %v130
    %134 = vmatpush.msra.mxu0 %v129
    %135 = vmatpush.msra.mxu0 %v128
    %136 = vmatpush.msra.mxu0 %v127
    %137 = vmatpush.msra.mxu0 %v126
    %138 = vmatpush.msra.mxu0 %v125
    %139 = vmatpush.msra.mxu0 %v124
    %140 = vmatpush.msra.mxu0 %v123
    %141 = vmatpush.msra.mxu0 %v122
    %142 = vmatpush.msra.mxu0 %v121
    %143 = vmatpush.msra.mxu0 %v120
    %144 = vmatpush.msra.mxu0 %v119
    %145 = vmatpush.msra.mxu0 %v118
    %146 = vmatpush.msra.mxu0 %v117
    %147 = vmatpush.msra.mxu0 %v116
    %148 = vmatmul.f32.gmra.mxu0 %v115
    %v149 = vpop.f32.mrf.mxu0
    %v150 = vadd.f32 0.0, %v149
    %151 = vdwg.mxu0
    %v152 = vmax.f32 %v150, 0.0
    %v153 = vld [vmem:[#allocation7 + $0xa8] sm:$0xff]
    %v154 = vld [vmem:[#allocation7 + $0xb0] sm:$0xff]
    %v155 = vld [vmem:[#allocation7 + $0xb8] sm:$0xff]
    %v156 = vld [vmem:[#allocation7 + $0xc0] sm:$0xff]
    %v157 = vld [vmem:[#allocation7 + $0xc8] sm:$0xff]
    %v158 = vld [vmem:[#allocation7 + $0xd0] sm:$0xff]
    %v159 = vld [vmem:[#allocation7 + $0xd8] sm:$0xff]
    %v160 = vld [vmem:[#allocation7 + $0xe0] sm:$0xff]
    %v161 = vld [vmem:[#allocation7 + $0xe8] sm:$0xff]
    %v162 = vld [vmem:[#allocation7 + $0xf0] sm:$0xff]
    %v163 = vld [vmem:[#allocation7 + $0xf8] sm:$0xff]
    %v164 = vld [vmem:[#allocation7 + $0x100] sm:$0xff]
    %v165 = vld [vmem:[#allocation7 + $0x108] sm:$0xff]
    %v166 = vld [vmem:[#allocation7 + $0x110] sm:$0xff]
    %v167 = vld [vmem:[#allocation7 + $0x118] sm:$0xff]
    %v168 = vld [vmem:[#allocation7 + $0x120] sm:$0xff]
    %169 = vmatpush.msra.mxu0 %v168
    %170 = vmatpush.msra.mxu0 %v167
    %171 = vmatpush.msra.mxu0 %v166
    %172 = vmatpush.msra.mxu0 %v165
    %173 = vmatpush.msra.mxu0 %v164
    %174 = vmatpush.msra.mxu0 %v163
    %175 = vmatpush.msra.mxu0 %v162
    %176 = vmatpush.msra.mxu0 %v161
    %177 = vmatpush.msra.mxu0 %v160
    %178 = vmatpush.msra.mxu0 %v159
    %179 = vmatpush.msra.mxu0 %v158
    %180 = vmatpush.msra.mxu0 %v157
    %181 = vmatpush.msra.mxu0 %v156
    %182 = vmatpush.msra.mxu0 %v155
    %183 = vmatpush.msra.mxu0 %v154
    %184 = vmatpush.msra.mxu0 %v153
    %185 = vmatmul.f32.gmra.mxu0 %v152
    %v186 = vpop.f32.mrf.mxu0
    %v187 = vadd.f32 0.0, %v186
    %188 = vdwg.mxu0
    %v189 = vmax.f32 %v187, 0.0
    %v190 = vld [vmem:[#allocation7 + $0x128] sm:$0xff]
    %v191 = vld [vmem:[#allocation7 + $0x130] sm:$0xff]
    %v192 = vld [vmem:[#allocation7 + $0x138] sm:$0xff]
    %v193 = vld [vmem:[#allocation7 + $0x140] sm:$0xff]
    %v194 = vld [vmem:[#allocation7 + $0x148] sm:$0xff]
    %v195 = vld [vmem:[#allocation7 + $0x150] sm:$0xff]
    %v196 = vld [vmem:[#allocation7 + $0x158] sm:$0xff]
    %v197 = vld [vmem:[#allocation7 + $0x160] sm:$0xff]
    %v198 = vld [vmem:[#allocation7 + $0x168] sm:$0xff]
    %v199 = vld [vmem:[#allocation7 + $0x170] sm:$0xff]
    %v200 = vld [vmem:[#allocation7 + $0x178] sm:$0xff]
    %v201 = vld [vmem:[#allocation7 + $0x180] sm:$0xff]
    %v202 = vld [vmem:[#allocation7 + $0x188] sm:$0xff]
    %v203 = vld [vmem:[#allocation7 + $0x190] sm:$0xff]
    %v204 = vld [vmem:[#allocation7 + $0x198] sm:$0xff]
    %v205 = vld [vmem:[#allocation7 + $0x1a0] sm:$0xff]
    %206 = vmatpush.msra.mxu0 %v205
    %207 = vmatpush.msra.mxu0 %v204
    %208 = vmatpush.msra.mxu0 %v203
    %209 = vmatpush.msra.mxu0 %v202
    %210 = vmatpush.msra.mxu0 %v201
    %211 = vmatpush.msra.mxu0 %v200
    %212 = vmatpush.msra.mxu0 %v199
    %213 = vmatpush.msra.mxu0 %v198
    %214 = vmatpush.msra.mxu0 %v197
    %215 = vmatpush.msra.mxu0 %v196
    %216 = vmatpush.msra.mxu0 %v195
    %217 = vmatpush.msra.mxu0 %v194
    %218 = vmatpush.msra.mxu0 %v193
    %219 = vmatpush.msra.mxu0 %v192
    %220 = vmatpush.msra.mxu0 %v191
    %221 = vmatpush.msra.mxu0 %v190
    %222 = vmatmul.f32.gmra.mxu0 %v189
    %v223 = vpop.f32.mrf.mxu0
    %v224 = vadd.f32 0.0, %v223
    %225 = vdwg.mxu0
    %v226 = vmax.f32 %v224, 0.0
    %v227 = vld [vmem:[#allocation7 + $0x1a8] sm:$0xff]
    %v228 = vld [vmem:[#allocation7 + $0x1b0] sm:$0xff]
    %v229 = vld [vmem:[#allocation7 + $0x1b8] sm:$0xff]
    %v230 = vld [vmem:[#allocation7 + $0x1c0] sm:$0xff]
    %v231 = vld [vmem:[#allocation7 + $0x1c8] sm:$0xff]
    %v232 = vld [vmem:[#allocation7 + $0x1d0] sm:$0xff]
    %v233 = vld [vmem:[#allocation7 + $0x1d8] sm:$0xff]
    %v234 = vld [vmem:[#allocation7 + $0x1e0] sm:$0xff]
    %v235 = vld [vmem:[#allocation7 + $0x1e8] sm:$0xff]
    %v236 = vld [vmem:[#allocation7 + $0x1f0] sm:$0xff]
    %v237 = vld [vmem:[#allocation7 + $0x1f8] sm:$0xff]
    %v238 = vld [vmem:[#allocation7 + $0x200] sm:$0xff]
    %v239 = vld [vmem:[#allocation7 + $0x208] sm:$0xff]
    %v240 = vld [vmem:[#allocation7 + $0x210] sm:$0xff]
    %v241 = vld [vmem:[#allocation7 + $0x218] sm:$0xff]
    %v242 = vld [vmem:[#allocation7 + $0x220] sm:$0xff]
    %243 = vmatpush.msra.mxu0 %v242
    %244 = vmatpush.msra.mxu0 %v241
    %245 = vmatpush.msra.mxu0 %v240
    %246 = vmatpush.msra.mxu0 %v239
    %247 = vmatpush.msra.mxu0 %v238
    %248 = vmatpush.msra.mxu0 %v237
    %249 = vmatpush.msra.mxu0 %v236
    %250 = vmatpush.msra.mxu0 %v235
    %251 = vmatpush.msra.mxu0 %v234
    %252 = vmatpush.msra.mxu0 %v233
    %253 = vmatpush.msra.mxu0 %v232
    %254 = vmatpush.msra.mxu0 %v231
    %255 = vmatpush.msra.mxu0 %v230
    %256 = vmatpush.msra.mxu0 %v229
    %257 = vmatpush.msra.mxu0 %v228
    %258 = vmatpush.msra.mxu0 %v227
    %259 = vmatmul.f32.gmra.mxu0 %v226
    %v260 = vpop.f32.mrf.mxu0
    %v261 = vadd.f32 0.0, %v260
    %262 = vdwg.mxu0
    %263 = vst [vmem:[#allocation8] sm:$0xff] %v261
    // Predicated region
    $region26: #{tpu_custom_call.1} parent=1 // pred_check
      _
    $region27: #{tpu_custom_call.1} parent=1 // pred_check_branch
      %265 = sbr.rel (0) target = $region29
    $region28: #{tpu_custom_call.1} parent=1 // pred_region
      %267 = vsyncadd [#allocation4], 0
      %s269 = sshll.u32 [#allocation8], 4
      %s270 = int_to_ptr.vmem [resolvable:$true] %s269
      %s271 = sshll.u32 %s3, 4
      %s272 = int_to_ptr.hbm [resolvable:$true] %s271
      %274 = dma.vmem_to_hbm [thread:$0]  %s270, 128, %s272, [#allocation4]
    $region29: #{tpu_custom_call.1} parent=1 // pred_fallthru
      _
    // Predicated region
    $region30: #{tpu_custom_call.1} parent=1 // pred_check
      _
    $region31: #{tpu_custom_call.1} parent=1 // pred_check_branch
      %276 = sbr.rel (0) target = $region33
    $region32: #{tpu_custom_call.1} parent=1 // pred_region
      %278 = dma.done [#allocation4], 128
    $region33: #{tpu_custom_call.1} parent=1 // pred_fallthru
      _
    %279 = vsyncpa [#allocation3], 1
    %280 = vsyncpa [#allocation6], 1
    %281 = vsyncpa [#allocation4], 1

</llo_original>
